<compile_context>
chip_gen: v7x
topology: tpu7x:2x2x1
jax: 0.10.0
libtpu: 0.0.40
codegen_flags: <defaults>
</compile_context>

<pallas_src>
import functools

import jax
import jax.numpy as jnp
from jax import lax
from jax.experimental import pallas as pl
from jax.experimental.pallas import tpu as pltpu

_BN_EPS = 1e-5


def _dw_pad(W):
    """Lane padding (per side) for the flat depthwise scratch: >= W+1, tile aligned."""
    return ((W + 1 + 127) // 128) * 128


def _inverted_residual_kernel(x_ref, w1_ref, b1_ref, wdw_ref, b2_ref,
                              w3_ref, b3_ref, o_ref, *scratch,
                              stride, use_res, H, W):
    """One block of `nb` images.  Layout: (nb, C, H*W), spatial on lanes, f32 acc."""
    nb, Cin, P = x_ref.shape
    Cexp = w1_ref.shape[0]
    _, Cout, Pout = o_ref.shape
    Hout = (H - 1) // stride + 1
    Wout = (W - 1) // stride + 1
    f32 = jnp.float32
    pad = _dw_pad(W)

    pad_ref = scratch[0]                                       # (nb, Cexp, pad+P+pad)

    x3 = x_ref[...].astype(f32)                                # (nb, Cin, P)

    # ---- 1x1 expand conv (BN scale pre-folded into w1) + bias + ReLU6 ----
    # Contraction dim is tiny -> unrolled VPU broadcast-FMAs instead of MXU.
    w1t = w1_ref[...].astype(f32)                              # (Cexp, Cin)
    h1 = None
    for ci in range(Cin):
        term = x3[:, ci:ci + 1, :] * w1t[:, ci:ci + 1].reshape(1, Cexp, 1)
        h1 = term if h1 is None else h1 + term                 # (nb, Cexp, P)
    h1 = jnp.clip(h1 + b1_ref[...].reshape(1, Cexp, 1), 0.0, 6.0)

    # ---- 3x3 depthwise conv, padding=1 ----
    # Spatial is flat on lanes: tap (dh, dw) is the window at offset dh*W+dw.
    # Halos are zero so flat out-of-range reads (the H boundary) give 0; only
    # the within-row W boundary needs a mask.  Halo re-zeroed every step so a
    # megacore-sharded grid (per-core scratch) stays correct.
    pad_ref[:, :, :pad] = jnp.zeros((nb, Cexp, pad), f32)
    pad_ref[:, :, pad + P:] = jnp.zeros((nb, Cexp, pad), f32)
    pad_ref[:, :, pad:pad + P] = h1                            # lane-tile aligned store

    widx = lax.broadcasted_iota(jnp.int32, (nb, Cexp, P), 2) % W
    mask_w = {-1: widx >= 1, 0: None, 1: widx < (W - 1)}

    wdwt = wdw_ref[...].astype(f32)                            # (Cexp, 9)
    acc = None
    for kh in range(3):
        dh = kh - 1
        for kw in range(3):
            dw = kw - 1
            tap = kh * 3 + kw
            wt = wdwt[:, tap:tap + 1].reshape(1, Cexp, 1)
            s = dh * W + dw
            win = h1 if s == 0 else pad_ref[:, :, pad + s:pad + s + P]
            term = win * wt
            if mask_w[dw] is not None:
                term = jnp.where(mask_w[dw], term, 0.0)
            acc = term if acc is None else acc + term          # (nb, Cexp, P)

    if stride == 2:
        # One double-strided read of the full-resolution result.
        dw_scr = scratch[1]                                    # (nb, Cexp, H, W)
        dw_scr[...] = acc.reshape(nb, Cexp, H, W)
        acc = dw_scr[:, :, pl.ds(0, Hout, stride=2), pl.ds(0, Wout, stride=2)]
        acc = acc.reshape(nb, Cexp, Pout)

    h2 = jnp.clip(acc + b2_ref[...].reshape(1, Cexp, 1), 0.0, 6.0)

    # ---- 1x1 project conv (BN scale pre-folded into w3) + bias (+ residual) ----
    w3t = w3_ref[...].astype(f32)                              # (Cout, Cexp)
    out = None
    for ce in range(Cexp):
        term = h2[:, ce:ce + 1, :] * w3t[:, ce:ce + 1].reshape(1, Cout, 1)
        out = term if out is None else out + term              # (nb, Cout, Pout)
    out = out + b3_ref[...].reshape(1, Cout, 1)
    if use_res:
        out = out + x3                                         # Cin == Cout, stride == 1
    o_ref[...] = out.astype(o_ref.dtype)


def inverted_residual_pallas(x_nchw, folded_params, *, stride, use_res,
                             images_per_block=None, param_dtype=jnp.float32):
    """x_nchw: (N, Cin, H, W), PyTorch layout.  Returns NCHW output."""
    assert stride in (1, 2)
    assert not (use_res and stride != 1)
    w1t, b1, wdwt, b2, w3t, b3 = folded_params
    N, Cin, H, W = x_nchw.shape
    Cexp = w1t.shape[0]
    Cout = w3t.shape[0]
    Hout = (H - 1) // stride + 1
    Wout = (W - 1) // stride + 1
    P, Pout = H * W, Hout * Wout

    # NCHW-native: only free (contiguous) reshapes, no HBM transpose passes.
    x = x_nchw.reshape(N, Cin, P).astype(param_dtype)
    w1t = w1t.astype(param_dtype)
    wdwt = wdwt.astype(param_dtype)
    w3t = w3t.astype(param_dtype)

    if images_per_block is None:
        # Batch images per grid step to amortize per-step overhead, but keep
        # >= 2 grid steps so a 2-TensorCore chip can shard the parallel axis.
        cap = max(1, min(8, N // 2))
        nb = 1
        for d in range(cap, 0, -1):
            if N % d == 0:
                nb = d
                break
    else:
        nb = images_per_block
    assert N % nb == 0
    grid = (N // nb,)

    wmap = lambda n: (0, 0)
    pad = _dw_pad(W)
    scratch_shapes = [pltpu.VMEM((nb, Cexp, pad + P + pad), jnp.float32)]
    if stride == 2:
        scratch_shapes.append(pltpu.VMEM((nb, Cexp, H, W), jnp.float32))

    kernel = functools.partial(_inverted_residual_kernel,
                               stride=stride, use_res=use_res, H=H, W=W)

    out = pl.pallas_call(
        kernel,
        out_shape=jax.ShapeDtypeStruct((N, Cout, Pout), x_nchw.dtype),
        grid=grid,
        in_specs=[
            pl.BlockSpec((nb, Cin, P), lambda n: (n, 0, 0)),
            pl.BlockSpec(w1t.shape, wmap),
            pl.BlockSpec(b1.shape, wmap),
            pl.BlockSpec(wdwt.shape, wmap),
            pl.BlockSpec(b2.shape, wmap),
            pl.BlockSpec(w3t.shape, wmap),
            pl.BlockSpec(b3.shape, wmap),
        ],
        out_specs=pl.BlockSpec((nb, Cout, Pout), lambda n: (n, 0, 0)),
        scratch_shapes=scratch_shapes,
        compiler_params=pltpu.CompilerParams(
            dimension_semantics=("parallel",)),
    )(x, w1t, b1, wdwt, b2, w3t, b3)

    return out.reshape(N, Cout, Hout, Wout)


# ---------------------------------------------------------------------------
# Parameter construction, inference-time BN folding, pure-JAX reference.
# ---------------------------------------------------------------------------
def make_raw_params(key, inp, oup, expand_ratio):
    cexp = inp * expand_ratio
    ks = jax.random.split(key, 6)

    def bn(k, c):
        kg, kb, km, kv = jax.random.split(k, 4)
        gamma = 0.5 + jax.random.uniform(kg, (c,), jnp.float32)
        beta = 0.1 * jax.random.normal(kb, (c,), jnp.float32)
        mean = 0.1 * jax.random.normal(km, (c,), jnp.float32)
        var = 0.5 + jax.random.uniform(kv, (c,), jnp.float32)
        return gamma, beta, mean, var

    # nn.Conv2d(inp, cexp, 1).weight (cexp, inp, 1, 1) stored as (inp, cexp)
    w1 = 0.1 * jax.random.normal(ks[0], (inp, cexp), jnp.float32)
    bn1 = bn(ks[1], cexp)
    # depthwise nn.Conv2d(cexp, cexp, 3, groups=cexp).weight (cexp,1,3,3) -> (9, cexp)
    wdw = 0.1 * jax.random.normal(ks[2], (9, cexp), jnp.float32)
    bn2 = bn(ks[3], cexp)
    # nn.Conv2d(cexp, oup, 1).weight (oup, cexp, 1, 1) stored as (cexp, oup)
    w3 = 0.1 * jax.random.normal(ks[4], (cexp, oup), jnp.float32)
    bn3 = bn(ks[5], oup)
    return dict(w1=w1, bn1=bn1, wdw=wdw, bn2=bn2, w3=w3, bn3=bn3)


def fold_params(raw, eps=_BN_EPS):
    """Inference-time BN folding: scale goes into the conv weights; only a
    per-channel bias remains for the kernel.  Weights are emitted in the
    kernel-ready transposed layout (contracted index on the lane axis),
    biases as (C, 1) columns for lane broadcast."""
    def scale_bias(bn):
        g, b, m, v = bn
        s = g / jnp.sqrt(v + eps)
        return s, b - m * s

    s1, b1 = scale_bias(raw["bn1"])
    s2, b2 = scale_bias(raw["bn2"])
    s3, b3 = scale_bias(raw["bn3"])
    w1t = (raw["w1"] * s1[None, :]).T          # (Cexp, Cin)
    wdwt = (raw["wdw"] * s2[None, :]).T        # (Cexp, 9)
    w3t = (raw["w3"] * s3[None, :]).T          # (Cout, Cexp)
    return (w1t, b1.reshape(-1, 1), wdwt, b2.reshape(-1, 1),
            w3t, b3.reshape(-1, 1))


def inverted_residual_ref(x_nchw, raw, *, stride, use_res, eps=_BN_EPS):
    """Pure-JAX reference using raw conv weights + explicit BatchNorm."""
    x = jnp.transpose(x_nchw, (0, 2, 3, 1))
    dn = ("NHWC", "HWIO", "NHWC")
    cexp = raw["w1"].shape[1]

    def bn_apply(h, bn):
        g, b, m, v = bn
        return (h - m) * (g / jnp.sqrt(v + eps)) + b

    h = lax.conv_general_dilated(x, raw["w1"].reshape(1, 1, *raw["w1"].shape),
                                 (1, 1), "VALID", dimension_numbers=dn)
    h = jnp.clip(bn_apply(h, raw["bn1"]), 0.0, 6.0)
    h = lax.conv_general_dilated(h, raw["wdw"].reshape(3, 3, 1, cexp),
                                 (stride, stride), ((1, 1), (1, 1)),
                                 dimension_numbers=dn, feature_group_count=cexp)
    h = jnp.clip(bn_apply(h, raw["bn2"]), 0.0, 6.0)
    h = lax.conv_general_dilated(h, raw["w3"].reshape(1, 1, *raw["w3"].shape),
                                 (1, 1), "VALID", dimension_numbers=dn)
    h = bn_apply(h, raw["bn3"])
    if use_res:
        h = h + x
    return jnp.transpose(h, (0, 3, 1, 2))


if __name__ == "__main__":
    # Small shapes consistent with the module: N=2, inp=oup=4, H=W=16,
    # stride=1, expand_ratio=2  ->  residual connection is active.
    N, inp, oup, H, W = 2, 4, 4, 16, 16
    stride, expand_ratio = 1, 2
    use_res = (stride == 1) and (inp == oup)

    key = jax.random.PRNGKey(0)
    kx, kp = jax.random.split(key)
    x = jax.random.normal(kx, (N, inp, H, W), jnp.float32)    # NCHW like PyTorch
    raw = make_raw_params(kp, inp, oup, expand_ratio)
    folded = fold_params(raw)

    out = inverted_residual_pallas(x, folded, stride=stride, use_res=use_res)
    out = jax.block_until_ready(out)

    ref = jax.block_until_ready(
        inverted_residual_ref(x, raw, stride=stride, use_res=use_res))

    assert out.shape == ref.shape == (N, oup, H // stride, W // stride)
    assert jnp.allclose(out, ref, rtol=1e-3, atol=1e-3), \
        f"max abs diff = {jnp.max(jnp.abs(out - ref))}"
    print("KERNEL_OK")
</pallas_src>

<mosaic_0001>
module attributes {stable_mosaic.version = 11 : i64} {
  func.func @_inverted_residual_kernel(%arg0: i32, %arg1: memref<1x4x256xf32, #tpu.memory_space<vmem>>, %arg2: memref<8x4xf32, #tpu.memory_space<vmem>>, %arg3: memref<8x1xf32, #tpu.memory_space<vmem>>, %arg4: memref<8x9xf32, #tpu.memory_space<vmem>>, %arg5: memref<8x1xf32, #tpu.memory_space<vmem>>, %arg6: memref<4x8xf32, #tpu.memory_space<vmem>>, %arg7: memref<4x1xf32, #tpu.memory_space<vmem>>, %arg8: memref<1x4x256xf32, #tpu.memory_space<vmem>>, %arg9: memref<1x8x512xf32, #tpu.memory_space<vmem>>) attributes {dimension_semantics = [#tpu.dimension_semantics<parallel>], iteration_bounds = array<i64: 2>, scalar_prefetch = 0 : i64, scratch_operands = 1 : i64, tpu.core_type = #tpu.core_type<tc>, window_params = [{transform_indices = @transform_0, window_bounds = array<i64: 1, 4, 256>}, {pipeline_mode = #tpu.pipeline_mode<synchronous>, transform_indices = @transform_1, window_bounds = array<i64: 8, 4>}, {pipeline_mode = #tpu.pipeline_mode<synchronous>, transform_indices = @transform_2, window_bounds = array<i64: 8, 1>}, {pipeline_mode = #tpu.pipeline_mode<synchronous>, transform_indices = @transform_3, window_bounds = array<i64: 8, 9>}, {pipeline_mode = #tpu.pipeline_mode<synchronous>, transform_indices = @transform_4, window_bounds = array<i64: 8, 1>}, {pipeline_mode = #tpu.pipeline_mode<synchronous>, transform_indices = @transform_5, window_bounds = array<i64: 4, 8>}, {pipeline_mode = #tpu.pipeline_mode<synchronous>, transform_indices = @transform_6, window_bounds = array<i64: 4, 1>}, {transform_indices = @transform_7, window_bounds = array<i64: 1, 4, 256>}]} {
    %c0 = arith.constant 0 : index
    %c0_0 = arith.constant 0 : index
    %c0_1 = arith.constant 0 : index
    %0 = vector.load %arg1[%c0, %c0_0, %c0_1] : memref<1x4x256xf32, #tpu.memory_space<vmem>>, vector<1x4x256xf32>
    %c0_2 = arith.constant 0 : index
    %c0_3 = arith.constant 0 : index
    %1 = vector.load %arg2[%c0_2, %c0_3] : memref<8x4xf32, #tpu.memory_space<vmem>>, vector<8x4xf32>
    %2 = vector.extract_strided_slice %0 {offsets = [0, 0, 0], sizes = [1, 1, 256], strides = [1, 1, 1]} : vector<1x4x256xf32> to vector<1x1x256xf32>
    %3 = vector.extract_strided_slice %1 {offsets = [0, 0], sizes = [8, 1], strides = [1, 1]} : vector<8x4xf32> to vector<8x1xf32>
    %4 = vector.shape_cast %3 : vector<8x1xf32> to vector<1x8x1xf32>
    %5 = vector.broadcast %2 : vector<1x1x256xf32> to vector<1x8x256xf32>
    %6 = vector.broadcast %4 : vector<1x8x1xf32> to vector<1x8x256xf32>
    %7 = arith.mulf %5, %6 : vector<1x8x256xf32>
    %8 = vector.extract_strided_slice %0 {offsets = [0, 1, 0], sizes = [1, 1, 256], strides = [1, 1, 1]} : vector<1x4x256xf32> to vector<1x1x256xf32>
    %9 = vector.extract_strided_slice %1 {offsets = [0, 1], sizes = [8, 1], strides = [1, 1]} : vector<8x4xf32> to vector<8x1xf32>
    %10 = vector.shape_cast %9 : vector<8x1xf32> to vector<1x8x1xf32>
    %11 = vector.broadcast %8 : vector<1x1x256xf32> to vector<1x8x256xf32>
    %12 = vector.broadcast %10 : vector<1x8x1xf32> to vector<1x8x256xf32>
    %13 = arith.mulf %11, %12 : vector<1x8x256xf32>
    %14 = arith.addf %7, %13 : vector<1x8x256xf32>
    %15 = vector.extract_strided_slice %0 {offsets = [0, 2, 0], sizes = [1, 1, 256], strides = [1, 1, 1]} : vector<1x4x256xf32> to vector<1x1x256xf32>
    %16 = vector.extract_strided_slice %1 {offsets = [0, 2], sizes = [8, 1], strides = [1, 1]} : vector<8x4xf32> to vector<8x1xf32>
    %17 = vector.shape_cast %16 : vector<8x1xf32> to vector<1x8x1xf32>
    %18 = vector.broadcast %15 : vector<1x1x256xf32> to vector<1x8x256xf32>
    %19 = vector.broadcast %17 : vector<1x8x1xf32> to vector<1x8x256xf32>
    %20 = arith.mulf %18, %19 : vector<1x8x256xf32>
    %21 = arith.addf %14, %20 : vector<1x8x256xf32>
    %22 = vector.extract_strided_slice %0 {offsets = [0, 3, 0], sizes = [1, 1, 256], strides = [1, 1, 1]} : vector<1x4x256xf32> to vector<1x1x256xf32>
    %23 = vector.extract_strided_slice %1 {offsets = [0, 3], sizes = [8, 1], strides = [1, 1]} : vector<8x4xf32> to vector<8x1xf32>
    %24 = vector.shape_cast %23 : vector<8x1xf32> to vector<1x8x1xf32>
    %25 = vector.broadcast %22 : vector<1x1x256xf32> to vector<1x8x256xf32>
    %26 = vector.broadcast %24 : vector<1x8x1xf32> to vector<1x8x256xf32>
    %27 = arith.mulf %25, %26 : vector<1x8x256xf32>
    %28 = arith.addf %21, %27 : vector<1x8x256xf32>
    %c0_4 = arith.constant 0 : index
    %c0_5 = arith.constant 0 : index
    %29 = vector.load %arg3[%c0_4, %c0_5] : memref<8x1xf32, #tpu.memory_space<vmem>>, vector<8x1xf32>
    %30 = vector.shape_cast %29 : vector<8x1xf32> to vector<1x8x1xf32>
    %31 = vector.broadcast %30 : vector<1x8x1xf32> to vector<1x8x256xf32>
    %32 = arith.addf %28, %31 : vector<1x8x256xf32>
    %cst = arith.constant 0.000000e+00 : f32
    %cst_6 = arith.constant 6.000000e+00 : f32
    %33 = vector.broadcast %cst : f32 to vector<1x8x256xf32>
    %34 = arith.maximumf %33, %32 : vector<1x8x256xf32>
    %35 = vector.broadcast %cst_6 : f32 to vector<1x8x256xf32>
    %36 = arith.minimumf %35, %34 : vector<1x8x256xf32>
    %cst_7 = arith.constant 0.000000e+00 : f32
    %37 = vector.broadcast %cst_7 : f32 to vector<1x8x128xf32>
    %c0_8 = arith.constant 0 : index
    %c0_9 = arith.constant 0 : index
    %c0_10 = arith.constant 0 : index
    %38 = vector.load %arg9[%c0_8, %c0_9, %c0_10] : memref<1x8x512xf32, #tpu.memory_space<vmem>>, vector<1x8x128xf32>
    tpu.vector_store %arg9[%c0_8, %c0_9, %c0_10], %37 {strides = array<i32>} : memref<1x8x512xf32, #tpu.memory_space<vmem>>, vector<1x8x128xf32>,
    %cst_11 = arith.constant 0.000000e+00 : f32
    %39 = vector.broadcast %cst_11 : f32 to vector<1x8x128xf32>
    %c0_12 = arith.constant 0 : index
    %c0_13 = arith.constant 0 : index
    %c384 = arith.constant 384 : index
    %40 = vector.load %arg9[%c0_12, %c0_13, %c384] : memref<1x8x512xf32, #tpu.memory_space<vmem>>, vector<1x8x128xf32>
    tpu.vector_store %arg9[%c0_12, %c0_13, %c384], %39 {strides = array<i32>} : memref<1x8x512xf32, #tpu.memory_space<vmem>>, vector<1x8x128xf32>,
    %c0_14 = arith.constant 0 : index
    %c0_15 = arith.constant 0 : index
    %c128 = arith.constant 128 : index
    %41 = vector.load %arg9[%c0_14, %c0_15, %c128] : memref<1x8x512xf32, #tpu.memory_space<vmem>>, vector<1x8x256xf32>
    tpu.vector_store %arg9[%c0_14, %c0_15, %c128], %36 {strides = array<i32>} : memref<1x8x512xf32, #tpu.memory_space<vmem>>, vector<1x8x256xf32>,
    %42 = tpu.iota {dimensions = array<i32: 2>} : vector<1x8x256xi32>
    %c16_i32 = arith.constant 16 : i32
    %c0_i32 = arith.constant 0 : i32
    %43 = arith.cmpi eq, %c16_i32, %c0_i32 : i32
    %c1_i32 = arith.constant 1 : i32
    %44 = arith.select %43, %c1_i32, %c16_i32 : i32
    %45 = vector.broadcast %44 : i32 to vector<1x8x256xi32>
    %46 = arith.remsi %42, %45 : vector<1x8x256xi32>
    %c0_i32_16 = arith.constant 0 : i32
    %47 = vector.broadcast %c0_i32_16 : i32 to vector<1x8x256xi32>
    %48 = arith.cmpi ne, %46, %47 : vector<1x8x256xi32>
    %c0_i32_17 = arith.constant 0 : i32
    %49 = vector.broadcast %c0_i32_17 : i32 to vector<1x8x256xi32>
    %50 = arith.cmpi slt, %46, %49 : vector<1x8x256xi32>
    %c0_i32_18 = arith.constant 0 : i32
    %51 = arith.cmpi slt, %44, %c0_i32_18 : i32
    %52 = vector.broadcast %51 : i1 to vector<1x8x256xi1>
    %53 = vector.broadcast %52 : vector<1x8x256xi1> to vector<1x8x256xi1>
    %54 = arith.xori %50, %53 : vector<1x8x256xi1>
    %55 = arith.andi %54, %48 : vector<1x8x256xi1>
    %56 = vector.broadcast %44 : i32 to vector<1x8x256xi32>
    %57 = arith.addi %46, %56 : vector<1x8x256xi32>
    %58 = arith.select %55, %57, %46 : vector<1x8x256xi1>, vector<1x8x256xi32>
    %c1_i32_19 = arith.constant 1 : i32
    %59 = vector.broadcast %c1_i32_19 : i32 to vector<1x8x256xi32>
    %60 = arith.cmpi sge, %58, %59 : vector<1x8x256xi32>
    %c15_i32 = arith.constant 15 : i32
    %61 = vector.broadcast %c15_i32 : i32 to vector<1x8x256xi32>
    %62 = arith.cmpi slt, %58, %61 : vector<1x8x256xi32>
    %c0_20 = arith.constant 0 : index
    %c0_21 = arith.constant 0 : index
    %63 = vector.load %arg4[%c0_20, %c0_21] : memref<8x9xf32, #tpu.memory_space<vmem>>, vector<8x9xf32>
    %64 = vector.extract_strided_slice %63 {offsets = [0, 0], sizes = [8, 1], strides = [1, 1]} : vector<8x9xf32> to vector<8x1xf32>
    %65 = vector.shape_cast %64 : vector<8x1xf32> to vector<1x8x1xf32>
    %c0_22 = arith.constant 0 : index
    %c0_23 = arith.constant 0 : index
    %c111 = arith.constant 111 : index
    %66 = vector.load %arg9[%c0_22, %c0_23, %c111] : memref<1x8x512xf32, #tpu.memory_space<vmem>>, vector<1x8x256xf32>
    %67 = vector.broadcast %65 : vector<1x8x1xf32> to vector<1x8x256xf32>
    %68 = arith.mulf %66, %67 : vector<1x8x256xf32>
    %cst_24 = arith.constant 0.000000e+00 : f32
    %69 = vector.broadcast %cst_24 : f32 to vector<1x8x256xf32>
    %70 = arith.select %60, %68, %69 : vector<1x8x256xi1>, vector<1x8x256xf32>
    %71 = vector.extract_strided_slice %63 {offsets = [0, 1], sizes = [8, 1], strides = [1, 1]} : vector<8x9xf32> to vector<8x1xf32>
    %72 = vector.shape_cast %71 : vector<8x1xf32> to vector<1x8x1xf32>
    %c0_25 = arith.constant 0 : index
    %c0_26 = arith.constant 0 : index
    %c112 = arith.constant 112 : index
    %73 = vector.load %arg9[%c0_25, %c0_26, %c112] : memref<1x8x512xf32, #tpu.memory_space<vmem>>, vector<1x8x256xf32>
    %74 = vector.broadcast %72 : vector<1x8x1xf32> to vector<1x8x256xf32>
    %75 = arith.mulf %73, %74 : vector<1x8x256xf32>
    %76 = arith.addf %70, %75 : vector<1x8x256xf32>
    %77 = vector.extract_strided_slice %63 {offsets = [0, 2], sizes = [8, 1], strides = [1, 1]} : vector<8x9xf32> to vector<8x1xf32>
    %78 = vector.shape_cast %77 : vector<8x1xf32> to vector<1x8x1xf32>
    %c0_27 = arith.constant 0 : index
    %c0_28 = arith.constant 0 : index
    %c113 = arith.constant 113 : index
    %79 = vector.load %arg9[%c0_27, %c0_28, %c113] : memref<1x8x512xf32, #tpu.memory_space<vmem>>, vector<1x8x256xf32>
    %80 = vector.broadcast %78 : vector<1x8x1xf32> to vector<1x8x256xf32>
    %81 = arith.mulf %79, %80 : vector<1x8x256xf32>
    %cst_29 = arith.constant 0.000000e+00 : f32
    %82 = vector.broadcast %cst_29 : f32 to vector<1x8x256xf32>
    %83 = arith.select %62, %81, %82 : vector<1x8x256xi1>, vector<1x8x256xf32>
    %84 = arith.addf %76, %83 : vector<1x8x256xf32>
    %85 = vector.extract_strided_slice %63 {offsets = [0, 3], sizes = [8, 1], strides = [1, 1]} : vector<8x9xf32> to vector<8x1xf32>
    %86 = vector.shape_cast %85 : vector<8x1xf32> to vector<1x8x1xf32>
    %c0_30 = arith.constant 0 : index
    %c0_31 = arith.constant 0 : index
    %c127 = arith.constant 127 : index
    %87 = vector.load %arg9[%c0_30, %c0_31, %c127] : memref<1x8x512xf32, #tpu.memory_space<vmem>>, vector<1x8x256xf32>
    %88 = vector.broadcast %86 : vector<1x8x1xf32> to vector<1x8x256xf32>
    %89 = arith.mulf %87, %88 : vector<1x8x256xf32>
    %cst_32 = arith.constant 0.000000e+00 : f32
    %90 = vector.broadcast %cst_32 : f32 to vector<1x8x256xf32>
    %91 = arith.select %60, %89, %90 : vector<1x8x256xi1>, vector<1x8x256xf32>
    %92 = arith.addf %84, %91 : vector<1x8x256xf32>
    %93 = vector.extract_strided_slice %63 {offsets = [0, 4], sizes = [8, 1], strides = [1, 1]} : vector<8x9xf32> to vector<8x1xf32>
    %94 = vector.shape_cast %93 : vector<8x1xf32> to vector<1x8x1xf32>
    %95 = vector.broadcast %94 : vector<1x8x1xf32> to vector<1x8x256xf32>
    %96 = arith.mulf %36, %95 : vector<1x8x256xf32>
    %97 = arith.addf %92, %96 : vector<1x8x256xf32>
    %98 = vector.extract_strided_slice %63 {offsets = [0, 5], sizes = [8, 1], strides = [1, 1]} : vector<8x9xf32> to vector<8x1xf32>
    %99 = vector.shape_cast %98 : vector<8x1xf32> to vector<1x8x1xf32>
    %c0_33 = arith.constant 0 : index
    %c0_34 = arith.constant 0 : index
    %c129 = arith.constant 129 : index
    %100 = vector.load %arg9[%c0_33, %c0_34, %c129] : memref<1x8x512xf32, #tpu.memory_space<vmem>>, vector<1x8x256xf32>
    %101 = vector.broadcast %99 : vector<1x8x1xf32> to vector<1x8x256xf32>
    %102 = arith.mulf %100, %101 : vector<1x8x256xf32>
    %cst_35 = arith.constant 0.000000e+00 : f32
    %103 = vector.broadcast %cst_35 : f32 to vector<1x8x256xf32>
    %104 = arith.select %62, %102, %103 : vector<1x8x256xi1>, vector<1x8x256xf32>
    %105 = arith.addf %97, %104 : vector<1x8x256xf32>
    %106 = vector.extract_strided_slice %63 {offsets = [0, 6], sizes = [8, 1], strides = [1, 1]} : vector<8x9xf32> to vector<8x1xf32>
    %107 = vector.shape_cast %106 : vector<8x1xf32> to vector<1x8x1xf32>
    %c0_36 = arith.constant 0 : index
    %c0_37 = arith.constant 0 : index
    %c143 = arith.constant 143 : index
    %108 = vector.load %arg9[%c0_36, %c0_37, %c143] : memref<1x8x512xf32, #tpu.memory_space<vmem>>, vector<1x8x256xf32>
    %109 = vector.broadcast %107 : vector<1x8x1xf32> to vector<1x8x256xf32>
    %110 = arith.mulf %108, %109 : vector<1x8x256xf32>
    %cst_38 = arith.constant 0.000000e+00 : f32
    %111 = vector.broadcast %cst_38 : f32 to vector<1x8x256xf32>
    %112 = arith.select %60, %110, %111 : vector<1x8x256xi1>, vector<1x8x256xf32>
    %113 = arith.addf %105, %112 : vector<1x8x256xf32>
    %114 = vector.extract_strided_slice %63 {offsets = [0, 7], sizes = [8, 1], strides = [1, 1]} : vector<8x9xf32> to vector<8x1xf32>
    %115 = vector.shape_cast %114 : vector<8x1xf32> to vector<1x8x1xf32>
    %c0_39 = arith.constant 0 : index
    %c0_40 = arith.constant 0 : index
    %c144 = arith.constant 144 : index
    %116 = vector.load %arg9[%c0_39, %c0_40, %c144] : memref<1x8x512xf32, #tpu.memory_space<vmem>>, vector<1x8x256xf32>
    %117 = vector.broadcast %115 : vector<1x8x1xf32> to vector<1x8x256xf32>
    %118 = arith.mulf %116, %117 : vector<1x8x256xf32>
    %119 = arith.addf %113, %118 : vector<1x8x256xf32>
    %120 = vector.extract_strided_slice %63 {offsets = [0, 8], sizes = [8, 1], strides = [1, 1]} : vector<8x9xf32> to vector<8x1xf32>
    %121 = vector.shape_cast %120 : vector<8x1xf32> to vector<1x8x1xf32>
    %c0_41 = arith.constant 0 : index
    %c0_42 = arith.constant 0 : index
    %c145 = arith.constant 145 : index
    %122 = vector.load %arg9[%c0_41, %c0_42, %c145] : memref<1x8x512xf32, #tpu.memory_space<vmem>>, vector<1x8x256xf32>
    %123 = vector.broadcast %121 : vector<1x8x1xf32> to vector<1x8x256xf32>
    %124 = arith.mulf %122, %123 : vector<1x8x256xf32>
    %cst_43 = arith.constant 0.000000e+00 : f32
    %125 = vector.broadcast %cst_43 : f32 to vector<1x8x256xf32>
    %126 = arith.select %62, %124, %125 : vector<1x8x256xi1>, vector<1x8x256xf32>
    %127 = arith.addf %119, %126 : vector<1x8x256xf32>
    %c0_44 = arith.constant 0 : index
    %c0_45 = arith.constant 0 : index
    %128 = vector.load %arg5[%c0_44, %c0_45] : memref<8x1xf32, #tpu.memory_space<vmem>>, vector<8x1xf32>
    %129 = vector.shape_cast %128 : vector<8x1xf32> to vector<1x8x1xf32>
    %130 = vector.broadcast %129 : vector<1x8x1xf32> to vector<1x8x256xf32>
    %131 = arith.addf %127, %130 : vector<1x8x256xf32>
    %cst_46 = arith.constant 0.000000e+00 : f32
    %cst_47 = arith.constant 6.000000e+00 : f32
    %132 = vector.broadcast %cst_46 : f32 to vector<1x8x256xf32>
    %133 = arith.maximumf %132, %131 : vector<1x8x256xf32>
    %134 = vector.broadcast %cst_47 : f32 to vector<1x8x256xf32>
    %135 = arith.minimumf %134, %133 : vector<1x8x256xf32>
    %c0_48 = arith.constant 0 : index
    %c0_49 = arith.constant 0 : index
    %136 = vector.load %arg6[%c0_48, %c0_49] : memref<4x8xf32, #tpu.memory_space<vmem>>, vector<4x8xf32>
    %137 = vector.extract_strided_slice %135 {offsets = [0, 0, 0], sizes = [1, 1, 256], strides = [1, 1, 1]} : vector<1x8x256xf32> to vector<1x1x256xf32>
    %138 = vector.extract_strided_slice %136 {offsets = [0, 0], sizes = [4, 1], strides = [1, 1]} : vector<4x8xf32> to vector<4x1xf32>
    %139 = vector.shape_cast %138 : vector<4x1xf32> to vector<1x4x1xf32>
    %140 = vector.broadcast %137 : vector<1x1x256xf32> to vector<1x4x256xf32>
    %141 = vector.broadcast %139 : vector<1x4x1xf32> to vector<1x4x256xf32>
    %142 = arith.mulf %140, %141 : vector<1x4x256xf32>
    %143 = vector.extract_strided_slice %135 {offsets = [0, 1, 0], sizes = [1, 1, 256], strides = [1, 1, 1]} : vector<1x8x256xf32> to vector<1x1x256xf32>
    %144 = vector.extract_strided_slice %136 {offsets = [0, 1], sizes = [4, 1], strides = [1, 1]} : vector<4x8xf32> to vector<4x1xf32>
    %145 = vector.shape_cast %144 : vector<4x1xf32> to vector<1x4x1xf32>
    %146 = vector.broadcast %143 : vector<1x1x256xf32> to vector<1x4x256xf32>
    %147 = vector.broadcast %145 : vector<1x4x1xf32> to vector<1x4x256xf32>
    %148 = arith.mulf %146, %147 : vector<1x4x256xf32>
    %149 = arith.addf %142, %148 : vector<1x4x256xf32>
    %150 = vector.extract_strided_slice %135 {offsets = [0, 2, 0], sizes = [1, 1, 256], strides = [1, 1, 1]} : vector<1x8x256xf32> to vector<1x1x256xf32>
    %151 = vector.extract_strided_slice %136 {offsets = [0, 2], sizes = [4, 1], strides = [1, 1]} : vector<4x8xf32> to vector<4x1xf32>
    %152 = vector.shape_cast %151 : vector<4x1xf32> to vector<1x4x1xf32>
    %153 = vector.broadcast %150 : vector<1x1x256xf32> to vector<1x4x256xf32>
    %154 = vector.broadcast %152 : vector<1x4x1xf32> to vector<1x4x256xf32>
    %155 = arith.mulf %153, %154 : vector<1x4x256xf32>
    %156 = arith.addf %149, %155 : vector<1x4x256xf32>
    %157 = vector.extract_strided_slice %135 {offsets = [0, 3, 0], sizes = [1, 1, 256], strides = [1, 1, 1]} : vector<1x8x256xf32> to vector<1x1x256xf32>
    %158 = vector.extract_strided_slice %136 {offsets = [0, 3], sizes = [4, 1], strides = [1, 1]} : vector<4x8xf32> to vector<4x1xf32>
    %159 = vector.shape_cast %158 : vector<4x1xf32> to vector<1x4x1xf32>
    %160 = vector.broadcast %157 : vector<1x1x256xf32> to vector<1x4x256xf32>
    %161 = vector.broadcast %159 : vector<1x4x1xf32> to vector<1x4x256xf32>
    %162 = arith.mulf %160, %161 : vector<1x4x256xf32>
    %163 = arith.addf %156, %162 : vector<1x4x256xf32>
    %164 = vector.extract_strided_slice %135 {offsets = [0, 4, 0], sizes = [1, 1, 256], strides = [1, 1, 1]} : vector<1x8x256xf32> to vector<1x1x256xf32>
    %165 = vector.extract_strided_slice %136 {offsets = [0, 4], sizes = [4, 1], strides = [1, 1]} : vector<4x8xf32> to vector<4x1xf32>
    %166 = vector.shape_cast %165 : vector<4x1xf32> to vector<1x4x1xf32>
    %167 = vector.broadcast %164 : vector<1x1x256xf32> to vector<1x4x256xf32>
    %168 = vector.broadcast %166 : vector<1x4x1xf32> to vector<1x4x256xf32>
    %169 = arith.mulf %167, %168 : vector<1x4x256xf32>
    %170 = arith.addf %163, %169 : vector<1x4x256xf32>
    %171 = vector.extract_strided_slice %135 {offsets = [0, 5, 0], sizes = [1, 1, 256], strides = [1, 1, 1]} : vector<1x8x256xf32> to vector<1x1x256xf32>
    %172 = vector.extract_strided_slice %136 {offsets = [0, 5], sizes = [4, 1], strides = [1, 1]} : vector<4x8xf32> to vector<4x1xf32>
    %173 = vector.shape_cast %172 : vector<4x1xf32> to vector<1x4x1xf32>
    %174 = vector.broadcast %171 : vector<1x1x256xf32> to vector<1x4x256xf32>
    %175 = vector.broadcast %173 : vector<1x4x1xf32> to vector<1x4x256xf32>
    %176 = arith.mulf %174, %175 : vector<1x4x256xf32>
    %177 = arith.addf %170, %176 : vector<1x4x256xf32>
    %178 = vector.extract_strided_slice %135 {offsets = [0, 6, 0], sizes = [1, 1, 256], strides = [1, 1, 1]} : vector<1x8x256xf32> to vector<1x1x256xf32>
    %179 = vector.extract_strided_slice %136 {offsets = [0, 6], sizes = [4, 1], strides = [1, 1]} : vector<4x8xf32> to vector<4x1xf32>
    %180 = vector.shape_cast %179 : vector<4x1xf32> to vector<1x4x1xf32>
    %181 = vector.broadcast %178 : vector<1x1x256xf32> to vector<1x4x256xf32>
    %182 = vector.broadcast %180 : vector<1x4x1xf32> to vector<1x4x256xf32>
    %183 = arith.mulf %181, %182 : vector<1x4x256xf32>
    %184 = arith.addf %177, %183 : vector<1x4x256xf32>
    %185 = vector.extract_strided_slice %135 {offsets = [0, 7, 0], sizes = [1, 1, 256], strides = [1, 1, 1]} : vector<1x8x256xf32> to vector<1x1x256xf32>
    %186 = vector.extract_strided_slice %136 {offsets = [0, 7], sizes = [4, 1], strides = [1, 1]} : vector<4x8xf32> to vector<4x1xf32>
    %187 = vector.shape_cast %186 : vector<4x1xf32> to vector<1x4x1xf32>
    %188 = vector.broadcast %185 : vector<1x1x256xf32> to vector<1x4x256xf32>
    %189 = vector.broadcast %187 : vector<1x4x1xf32> to vector<1x4x256xf32>
    %190 = arith.mulf %188, %189 : vector<1x4x256xf32>
    %191 = arith.addf %184, %190 : vector<1x4x256xf32>
    %c0_50 = arith.constant 0 : index
    %c0_51 = arith.constant 0 : index
    %192 = vector.load %arg7[%c0_50, %c0_51] : memref<4x1xf32, #tpu.memory_space<vmem>>, vector<4x1xf32>
    %193 = vector.shape_cast %192 : vector<4x1xf32> to vector<1x4x1xf32>
    %194 = vector.broadcast %193 : vector<1x4x1xf32> to vector<1x4x256xf32>
    %195 = arith.addf %191, %194 : vector<1x4x256xf32>
    %196 = arith.addf %195, %0 : vector<1x4x256xf32>
    %c0_52 = arith.constant 0 : index
    %c0_53 = arith.constant 0 : index
    %c0_54 = arith.constant 0 : index
    %197 = vector.load %arg8[%c0_52, %c0_53, %c0_54] : memref<1x4x256xf32, #tpu.memory_space<vmem>>, vector<1x4x256xf32>
    tpu.vector_store %arg8[%c0_52, %c0_53, %c0_54], %196 {strides = array<i32>} : memref<1x4x256xf32, #tpu.memory_space<vmem>>, vector<1x4x256xf32>,
    return
  }
  func.func @transform_0(%arg0: i32) -> (i32, i32, i32) {
    %c0_i32 = arith.constant 0 : i32
    %c0_i32_0 = arith.constant 0 : i32
    %c0_i32_1 = arith.constant 0 : i32
    return %arg0, %c0_i32, %c0_i32_0 : i32, i32, i32
  }
  func.func @transform_1(%arg0: i32) -> (i32, i32) {
    %c0_i32 = arith.constant 0 : i32
    %c0_i32_0 = arith.constant 0 : i32
    %c0_i32_1 = arith.constant 0 : i32
    return %c0_i32, %c0_i32_0 : i32, i32
  }
  func.func @transform_2(%arg0: i32) -> (i32, i32) {
    %c0_i32 = arith.constant 0 : i32
    %c0_i32_0 = arith.constant 0 : i32
    %c0_i32_1 = arith.constant 0 : i32
    return %c0_i32, %c0_i32_0 : i32, i32
  }
  func.func @transform_3(%arg0: i32) -> (i32, i32) {
    %c0_i32 = arith.constant 0 : i32
    %c0_i32_0 = arith.constant 0 : i32
    %c0_i32_1 = arith.constant 0 : i32
    return %c0_i32, %c0_i32_0 : i32, i32
  }
  func.func @transform_4(%arg0: i32) -> (i32, i32) {
    %c0_i32 = arith.constant 0 : i32
    %c0_i32_0 = arith.constant 0 : i32
    %c0_i32_1 = arith.constant 0 : i32
    return %c0_i32, %c0_i32_0 : i32, i32
  }
  func.func @transform_5(%arg0: i32) -> (i32, i32) {
    %c0_i32 = arith.constant 0 : i32
    %c0_i32_0 = arith.constant 0 : i32
    %c0_i32_1 = arith.constant 0 : i32
    return %c0_i32, %c0_i32_0 : i32, i32
  }
  func.func @transform_6(%arg0: i32) -> (i32, i32) {
    %c0_i32 = arith.constant 0 : i32
    %c0_i32_0 = arith.constant 0 : i32
    %c0_i32_1 = arith.constant 0 : i32
    return %c0_i32, %c0_i32_0 : i32, i32
  }
  func.func @transform_7(%arg0: i32) -> (i32, i32, i32) {
    %c0_i32 = arith.constant 0 : i32
    %c0_i32_0 = arith.constant 0 : i32
    %c0_i32_1 = arith.constant 0 : i32
    return %arg0, %c0_i32, %c0_i32_0 : i32, i32, i32
  }
}

</mosaic_0001>

<llo_original>
// kernel: tpu_custom_call.1
$region0: #{tpu_custom_call.1}
  #allocation0 [shape = 'u32[]', space=smem, size = 0x4, offset = 0x4, fixed_abs, tag = 'smem constant byte address 0x4 - core index']
  #allocation1 [shape = 'u32[144,128]{1,0:T(1,128)}', space=vmem, size = 0x12000, scoped, tag = 'internal scratch']
  #allocation2 [shape = 'f32[1,8,512]{2,1,0:T(8,128)}', space=vmem, size = 0x4000, scoped, tag = 'scratch operand']
  %s0 = inlined_call_operand.vmem [shape: f32[2,4,256], index: 0, kind: input, shape index: {}]
  %s1 = inlined_call_operand.vmem [shape: f32[8,4], index: 1, kind: input, shape index: {}]
  %s2 = inlined_call_operand.vmem [shape: f32[8,1], index: 2, kind: input, shape index: {}]
  %s3 = inlined_call_operand.vmem [shape: f32[8,9], index: 3, kind: input, shape index: {}]
  %s4 = inlined_call_operand.vmem [shape: f32[8,1], index: 4, kind: input, shape index: {}]
  %s5 = inlined_call_operand.vmem [shape: f32[4,8], index: 5, kind: input, shape index: {}]
  %s6 = inlined_call_operand.vmem [shape: f32[4,1], index: 6, kind: input, shape index: {}]
  %s7 = inlined_call_operand.hbm [shape: f32[2,4,256], index: 7, kind: output, shape index: {}]
  %s8 = sld [smem:[#allocation0]]
  $region61: #{tpu_custom_call.1} parent=0
    _
  %s10 = ssub.s32 1, %s8
  %s11 = scalar_select 0, %s10, %s8
  $region1: #{tpu_custom_call.1} parent=0
    #allocation3 [shape = 'u8[8192]{0}', space=vmem, size = 0x2000, scoped, tag = 'output window, operand 0']
    #allocation4 [shape = 's32[2]{0}', space=sflag, size = 0x8, scoped, tag = 'scoped memory for tpu_custom_call.1']
    %12 = vsyncpa [#allocation4], 0
    %s13 = scalar_lea.sflag [#allocation4], 1
    %14 = vsyncpa %s13, 0
    loop: start=0, step=1, limit=4
    $region2: #{tpu_custom_call.1} parent=1 // loop_pre_header
      _
    $region3: #{tpu_custom_call.1} parent=1 // loop_header
      %s16 = sphi 0, %s20
      %p17 = scmp.ge.s32.totalorder %s16, 4
      %s26 = sphi 0, %s28
      %s29 = sphi 0, %s26
      %s30 = sphi 0, %s29
      %s46 = sphi 0, %s30
      %s50 = sphi 0, %s50
      %s52 = sphi 0, %s50
      %s53 = sphi 0, %s52
      %s67 = sphi 0, %s53
      %s71 = sphi 0, %s71
      %s73 = sphi 0, %s71
      %s74 = sphi 0, %s73
      %s88 = sphi 0, %s74
      %s92 = sphi 0, %s92
      %s94 = sphi 0, %s92
      %s95 = sphi 0, %s94
      %s109 = sphi 0, %s95
      %s113 = sphi 0, %s113
      %s115 = sphi 0, %s113
      %s116 = sphi 0, %s115
      %s130 = sphi 0, %s116
      %s134 = sphi 0, %s134
      %s136 = sphi 0, %s134
      %s137 = sphi 0, %s136
      %s151 = sphi 0, %s137
      %s155 = sphi 0, %s155
      %s157 = sphi 0, %s155
      %s158 = sphi 0, %s157
      %s172 = sphi 0, %s158
      %s178 = sphi 0, %s180
      %s181 = sphi 0, %s178
      %s182 = sphi 0, %s181
      %s198 = sphi 0, %s182
    $region4: #{tpu_custom_call.1} parent=1 // loop_header_branch
      %19 = sbr.rel (%p17) target = $region8
    $region5: #{tpu_custom_call.1} parent=1 // loop_body
      %s21 = ssub.s32 %s16, 1
      %s22 = ssub.s32 %s16, 2
      %s23 = sadd.s32 %s16, 1
      %s24 = ssub.s32 %s16, %s23
      %p25 = scmp.eq.s32.totalorder %s24, 0
      %s27 = sadd.s32 %s26, 1
      %s28 = scalar_select %p25, %s26, %s27
      %p31 = pneg %p25
      %p32 = scmp.eq.s32.totalorder %s16, 1
      %p33 = por %p31, %p32
      %p34 = scmp.ne.s32.totalorder %s26, %s29
      %p35 = scmp.eq.s32.totalorder %s16, 0
      %p36 = por %p34, %p35
      %p37 = scmp.ne.s32.totalorder %s26, %s29
      %p38 = scmp.eq.s32.totalorder %s21, 1
      %p39 = por %p37, %p38
      %p40 = scmp.ne.s32.totalorder %s29, %s30
      %p41 = scmp.eq.s32.totalorder %s21, 0
      %p42 = por %p40, %p41
      %p43 = scmp.ne.s32.totalorder %s29, %s30
      %p44 = scmp.eq.s32.totalorder %s22, 1
      %p45 = por %p43, %p44
      %p47 = scmp.ne.s32.totalorder %s30, %s46
      %p48 = scmp.eq.s32.totalorder %s22, 0
      %p49 = por %p47, %p48
      %s51 = sadd.s32 %s50, 1
      %p54 = scmp.eq.s32.totalorder %s16, 1
      %p55 = scmp.ne.s32.totalorder %s50, %s52
      %p56 = scmp.eq.s32.totalorder %s16, 0
      %p57 = por %p55, %p56
      %p58 = scmp.ne.s32.totalorder %s50, %s52
      %p59 = scmp.eq.s32.totalorder %s21, 1
      %p60 = por %p58, %p59
      %p61 = scmp.ne.s32.totalorder %s52, %s53
      %p62 = scmp.eq.s32.totalorder %s21, 0
      %p63 = por %p61, %p62
      %p64 = scmp.ne.s32.totalorder %s52, %s53
      %p65 = scmp.eq.s32.totalorder %s22, 1
      %p66 = por %p64, %p65
      %p68 = scmp.ne.s32.totalorder %s53, %s67
      %p69 = scmp.eq.s32.totalorder %s22, 0
      %p70 = por %p68, %p69
      %s72 = sadd.s32 %s71, 1
      %p75 = scmp.eq.s32.totalorder %s16, 1
      %p76 = scmp.ne.s32.totalorder %s71, %s73
      %p77 = scmp.eq.s32.totalorder %s16, 0
      %p78 = por %p76, %p77
      %p79 = scmp.ne.s32.totalorder %s71, %s73
      %p80 = scmp.eq.s32.totalorder %s21, 1
      %p81 = por %p79, %p80
      %p82 = scmp.ne.s32.totalorder %s73, %s74
      %p83 = scmp.eq.s32.totalorder %s21, 0
      %p84 = por %p82, %p83
      %p85 = scmp.ne.s32.totalorder %s73, %s74
      %p86 = scmp.eq.s32.totalorder %s22, 1
      %p87 = por %p85, %p86
      %p89 = scmp.ne.s32.totalorder %s74, %s88
      %p90 = scmp.eq.s32.totalorder %s22, 0
      %p91 = por %p89, %p90
      %s93 = sadd.s32 %s92, 1
      %p96 = scmp.eq.s32.totalorder %s16, 1
      %p97 = scmp.ne.s32.totalorder %s92, %s94
      %p98 = scmp.eq.s32.totalorder %s16, 0
      %p99 = por %p97, %p98
      %p100 = scmp.ne.s32.totalorder %s92, %s94
      %p101 = scmp.eq.s32.totalorder %s21, 1
      %p102 = por %p100, %p101
      %p103 = scmp.ne.s32.totalorder %s94, %s95
      %p104 = scmp.eq.s32.totalorder %s21, 0
      %p105 = por %p103, %p104
      %p106 = scmp.ne.s32.totalorder %s94, %s95
      %p107 = scmp.eq.s32.totalorder %s22, 1
      %p108 = por %p106, %p107
      %p110 = scmp.ne.s32.totalorder %s95, %s109
      %p111 = scmp.eq.s32.totalorder %s22, 0
      %p112 = por %p110, %p111
      %s114 = sadd.s32 %s113, 1
      %p117 = scmp.eq.s32.totalorder %s16, 1
      %p118 = scmp.ne.s32.totalorder %s113, %s115
      %p119 = scmp.eq.s32.totalorder %s16, 0
      %p120 = por %p118, %p119
      %p121 = scmp.ne.s32.totalorder %s113, %s115
      %p122 = scmp.eq.s32.totalorder %s21, 1
      %p123 = por %p121, %p122
      %p124 = scmp.ne.s32.totalorder %s115, %s116
      %p125 = scmp.eq.s32.totalorder %s21, 0
      %p126 = por %p124, %p125
      %p127 = scmp.ne.s32.totalorder %s115, %s116
      %p128 = scmp.eq.s32.totalorder %s22, 1
      %p129 = por %p127, %p128
      %p131 = scmp.ne.s32.totalorder %s116, %s130
      %p132 = scmp.eq.s32.totalorder %s22, 0
      %p133 = por %p131, %p132
      %s135 = sadd.s32 %s134, 1
      %p138 = scmp.eq.s32.totalorder %s16, 1
      %p139 = scmp.ne.s32.totalorder %s134, %s136
      %p140 = scmp.eq.s32.totalorder %s16, 0
      %p141 = por %p139, %p140
      %p142 = scmp.ne.s32.totalorder %s134, %s136
      %p143 = scmp.eq.s32.totalorder %s21, 1
      %p144 = por %p142, %p143
      %p145 = scmp.ne.s32.totalorder %s136, %s137
      %p146 = scmp.eq.s32.totalorder %s21, 0
      %p147 = por %p145, %p146
      %p148 = scmp.ne.s32.totalorder %s136, %s137
      %p149 = scmp.eq.s32.totalorder %s22, 1
      %p150 = por %p148, %p149
      %p152 = scmp.ne.s32.totalorder %s137, %s151
      %p153 = scmp.eq.s32.totalorder %s22, 0
      %p154 = por %p152, %p153
      %s156 = sadd.s32 %s155, 1
      %p159 = scmp.eq.s32.totalorder %s16, 1
      %p160 = scmp.ne.s32.totalorder %s155, %s157
      %p161 = scmp.eq.s32.totalorder %s16, 0
      %p162 = por %p160, %p161
      %p163 = scmp.ne.s32.totalorder %s155, %s157
      %p164 = scmp.eq.s32.totalorder %s21, 1
      %p165 = por %p163, %p164
      %p166 = scmp.ne.s32.totalorder %s157, %s158
      %p167 = scmp.eq.s32.totalorder %s21, 0
      %p168 = por %p166, %p167
      %p169 = scmp.ne.s32.totalorder %s157, %s158
      %p170 = scmp.eq.s32.totalorder %s22, 1
      %p171 = por %p169, %p170
      %p173 = scmp.ne.s32.totalorder %s158, %s172
      %p174 = scmp.eq.s32.totalorder %s22, 0
      %p175 = por %p173, %p174
      %s176 = ssub.s32 %s16, %s23
      %p177 = scmp.eq.s32.totalorder %s176, 0
      %s179 = sadd.s32 %s178, 1
      %s180 = scalar_select %p177, %s178, %s179
      %p183 = pneg %p177
      %p184 = scmp.eq.s32.totalorder %s16, 1
      %p185 = por %p183, %p184
      %p186 = scmp.ne.s32.totalorder %s178, %s181
      %p187 = scmp.eq.s32.totalorder %s16, 0
      %p188 = por %p186, %p187
      %p189 = scmp.ne.s32.totalorder %s178, %s181
      %p190 = scmp.eq.s32.totalorder %s21, 1
      %p191 = por %p189, %p190
      %p192 = scmp.ne.s32.totalorder %s181, %s182
      %p193 = scmp.eq.s32.totalorder %s21, 0
      %p194 = por %p192, %p193
      %p195 = scmp.ne.s32.totalorder %s181, %s182
      %p196 = scmp.eq.s32.totalorder %s22, 1
      %p197 = por %p195, %p196
      %p199 = scmp.ne.s32.totalorder %s182, %s198
      %p200 = scmp.eq.s32.totalorder %s22, 0
      %p201 = por %p199, %p200
      %p202 = scmp.le.s32.totalorder 1, %s16
      %p203 = scmp.lt.s32.totalorder %s16, 3
      %p204 = pnand %p202, %p203
      %p205 = pneg %p204
      // Predicated region
      $region9: #{tpu_custom_call.1} parent=5 // pred_check
        _
      $region10: #{tpu_custom_call.1} parent=5 // pred_check_branch
        %207 = sbr.rel (%p204) target = $region12
      $region11: #{tpu_custom_call.1} parent=5 // pred_region
        %s208 = ssub.s32 %s16, 1
        // Predicated region
        $region13: #{tpu_custom_call.1} parent=11 // pred_check
          %p209 = pneg %p63
        $region14: #{tpu_custom_call.1} parent=11 // pred_check_branch
          %211 = sbr.rel (%p209) target = $region16
        $region15: #{tpu_custom_call.1} parent=11 // pred_region
          _
        $region16: #{tpu_custom_call.1} parent=11 // pred_fallthru
          _
        // Predicated region
        $region17: #{tpu_custom_call.1} parent=11 // pred_check
          %p212 = pneg %p84
        $region18: #{tpu_custom_call.1} parent=11 // pred_check_branch
          %214 = sbr.rel (%p212) target = $region20
        $region19: #{tpu_custom_call.1} parent=11 // pred_region
          _
        $region20: #{tpu_custom_call.1} parent=11 // pred_fallthru
          _
        // Predicated region
        $region21: #{tpu_custom_call.1} parent=11 // pred_check
          %p215 = pneg %p105
        $region22: #{tpu_custom_call.1} parent=11 // pred_check_branch
          %217 = sbr.rel (%p215) target = $region24
        $region23: #{tpu_custom_call.1} parent=11 // pred_region
          _
        $region24: #{tpu_custom_call.1} parent=11 // pred_fallthru
          _
        // Predicated region
        $region25: #{tpu_custom_call.1} parent=11 // pred_check
          %p218 = pneg %p126
        $region26: #{tpu_custom_call.1} parent=11 // pred_check_branch
          %220 = sbr.rel (%p218) target = $region28
        $region27: #{tpu_custom_call.1} parent=11 // pred_region
          _
        $region28: #{tpu_custom_call.1} parent=11 // pred_fallthru
          _
        // Predicated region
        $region29: #{tpu_custom_call.1} parent=11 // pred_check
          %p221 = pneg %p147
        $region30: #{tpu_custom_call.1} parent=11 // pred_check_branch
          %223 = sbr.rel (%p221) target = $region32
        $region31: #{tpu_custom_call.1} parent=11 // pred_region
          _
        $region32: #{tpu_custom_call.1} parent=11 // pred_fallthru
          _
        // Predicated region
        $region33: #{tpu_custom_call.1} parent=11 // pred_check
          %p224 = pneg %p168
        $region34: #{tpu_custom_call.1} parent=11 // pred_check_branch
          %226 = sbr.rel (%p224) target = $region36
        $region35: #{tpu_custom_call.1} parent=11 // pred_region
          _
        $region36: #{tpu_custom_call.1} parent=11 // pred_fallthru
          _
      $region12: #{tpu_custom_call.1} parent=5 // pred_fallthru
        _
      %p227 = scmp.lt.s32.totalorder %s16, 2
      // Predicated region
      $region37: #{tpu_custom_call.1} parent=5 // pred_check
        %p228 = pneg %p227
      $region38: #{tpu_custom_call.1} parent=5 // pred_check_branch
        %230 = sbr.rel (%p228) target = $region40
      $region39: #{tpu_custom_call.1} parent=5 // pred_region
        // Predicated region
        $region41: #{tpu_custom_call.1} parent=39 // pred_check
          %p231 = pneg %p36
        $region42: #{tpu_custom_call.1} parent=39 // pred_check_branch
          %233 = sbr.rel (%p231) target = $region44
        $region43: #{tpu_custom_call.1} parent=39 // pred_region
          %p234 = scmp.lt.s32.totalorder %s16, 1
          %s235 = scalar_select %p234, %s16, 1
          %s236 = smul.addr %s235, 2
          %s237 = smul.addr %s236, 4
          %s238 = scalar_lea.vmem %s0, %s237
        $region44: #{tpu_custom_call.1} parent=39 // pred_fallthru
          _
      $region40: #{tpu_custom_call.1} parent=5 // pred_fallthru
        _
      %p239 = scmp.le.s32.totalorder 1, %s16
      %p240 = scmp.lt.s32.totalorder %s16, 3
      %p241 = pnand %p239, %p240
      %p242 = pneg %p241
      // Predicated region
      $region45: #{tpu_custom_call.1} parent=5 // pred_check
        _
      $region46: #{tpu_custom_call.1} parent=5 // pred_check_branch
        %244 = sbr.rel (%p241) target = $region48
      $region47: #{tpu_custom_call.1} parent=5 // pred_region
        %s245 = ssub.s32 %s16, 1
        %p246 = scmp.lt.s32.totalorder %s21, 1
        %s247 = scalar_select %p246, %s21, 1
        %s248 = smul.addr %s247, 2
        %s249 = smul.addr %s248, 4
        %s250 = scalar_lea.vmem %s0, %s249
        %p251 = pneg %p42
        %p252 = pneg %p39
        %p253 = pneg %p63
        %p254 = pneg %p60
        %p255 = pneg %p84
        %p256 = pneg %p81
        %p257 = pneg %p105
        %p258 = pneg %p102
        %p259 = pneg %p126
        %p260 = pneg %p123
        %p261 = pneg %p147
        %p262 = pneg %p144
        %p263 = pneg %p168
        %p264 = pneg %p165
        %p265 = pneg %p194
        %p266 = pneg %p191
        %s267 = sand.u32 %s181, 1
        %s268 = scalar_lea.sflag [#allocation4], %s267
        %s269 = sand.u32 %s181, 1
        %s270 = smul.addr %s269, 8
        %s271 = scalar_lea.vmem [#allocation3], %s270
        %p272 = scmp.lt.s32.totalorder %s21, 1
        %s273 = scalar_select %p272, %s21, 1
        %s274 = smul.addr %s273, 2
        %s275 = smul.addr %s274, 4
        %s276 = scalar_lea.vmem %s0, %s275
        %v277 = vld [vmem:[%s276] sm:$0xff]
        %v278 = vld [vmem:[%s1] sm:$0xff]
        %v280 = vlaneseq
        %v281 = vshrl.u32 %v280, 7
        %v282 = vsub.s32 0, %v281
        %v283 = vrot.slane %v277, %v282
        %v284 = vlaneseq
        %v285 = vshrl.u32 %v284, 7
        %v286 = vsub.s32 4, %v285
        %v287 = vrot.slane %v277, %v286
        %v290 = vlaneseq
        %v291 = vshrl.u32 %v290, 7
        %v292 = vsub.s32 0, %v291
        %v293 = vrot.slane %v283, %v292
        %v294 = vlaneseq
        %v295 = vshrl.u32 %v294, 7
        %v296 = vsub.s32 0, %v295
        %v297 = vrot.slane %v287, %v296
        %299 = vset.pattern.permute.xlu0 0
        %300 = vperm.xlu0 %299, %v278
        %v301 = vpop.permute.xlu0 %300
        %v303 = vmul.f32 %v293, %v301
        %v304 = vmul.f32 %v297, %v301
        %v305 = vlaneseq
        %v306 = vshrl.u32 %v305, 7
        %v307 = vsub.s32 1, %v306
        %v308 = vrot.slane %v277, %v307
        %v309 = vlaneseq
        %v310 = vshrl.u32 %v309, 7
        %v311 = vsub.s32 5, %v310
        %v312 = vrot.slane %v277, %v311
        %v315 = vlaneseq
        %v316 = vshrl.u32 %v315, 7
        %v317 = vsub.s32 1, %v316
        %v318 = vrot.slane %v308, %v317
        %v319 = vlaneseq
        %v320 = vshrl.u32 %v319, 7
        %v321 = vsub.s32 1, %v320
        %v322 = vrot.slane %v312, %v321
        %323 = vset.pattern.permute.xlu0 1
        %324 = vperm.xlu0 %323, %v278
        %v325 = vpop.permute.xlu0 %324
        %v327 = vmul.f32 %v318, %v325
        %v328 = vmul.f32 %v322, %v325
        %v329 = vadd.f32 %v303, %v327
        %v330 = vadd.f32 %v304, %v328
        %v331 = vlaneseq
        %v332 = vshrl.u32 %v331, 7
        %v333 = vsub.s32 2, %v332
        %v334 = vrot.slane %v277, %v333
        %v335 = vlaneseq
        %v336 = vshrl.u32 %v335, 7
        %v337 = vsub.s32 6, %v336
        %v338 = vrot.slane %v277, %v337
        %v341 = vlaneseq
        %v342 = vshrl.u32 %v341, 7
        %v343 = vsub.s32 2, %v342
        %v344 = vrot.slane %v334, %v343
        %v345 = vlaneseq
        %v346 = vshrl.u32 %v345, 7
        %v347 = vsub.s32 2, %v346
        %v348 = vrot.slane %v338, %v347
        %349 = vset.pattern.permute.xlu0 2
        %350 = vperm.xlu0 %349, %v278
        %v351 = vpop.permute.xlu0 %350
        %v353 = vmul.f32 %v344, %v351
        %v354 = vmul.f32 %v348, %v351
        %v355 = vadd.f32 %v329, %v353
        %v356 = vadd.f32 %v330, %v354
        %v357 = vlaneseq
        %v358 = vshrl.u32 %v357, 7
        %v359 = vsub.s32 3, %v358
        %v360 = vrot.slane %v277, %v359
        %v361 = vlaneseq
        %v362 = vshrl.u32 %v361, 7
        %v363 = vsub.s32 7, %v362
        %v364 = vrot.slane %v277, %v363
        %v367 = vlaneseq
        %v368 = vshrl.u32 %v367, 7
        %v369 = vsub.s32 3, %v368
        %v370 = vrot.slane %v360, %v369
        %v371 = vlaneseq
        %v372 = vshrl.u32 %v371, 7
        %v373 = vsub.s32 3, %v372
        %v374 = vrot.slane %v364, %v373
        %375 = vset.pattern.permute.xlu0 3
        %376 = vperm.xlu0 %375, %v278
        %v377 = vpop.permute.xlu0 %376
        %v379 = vmul.f32 %v370, %v377
        %v380 = vmul.f32 %v374, %v377
        %v381 = vadd.f32 %v355, %v379
        %v382 = vadd.f32 %v356, %v380
        %v383 = vld [vmem:[%s2] sm:$0xff]
        %385 = vset.pattern.permute.xlu0 0
        %386 = vperm.xlu0 %385, %v383
        %v387 = vpop.permute.xlu0 %386
        %v389 = vadd.f32 %v381, %v387
        %v390 = vadd.f32 %v382, %v387
        %v391 = vmax.f32 %v389, 0.0
        %v392 = vmax.f32 %v390, 0.0
        %v393 = vmin.f32 %v391, 6.0
        %v394 = vmin.f32 %v392, 6.0
        %395 = vst [vmem:[#allocation2] sm:$0xff] 0.0
        %396 = vst [vmem:[#allocation2 + $0x18] sm:$0xff] 0.0
        %397 = vst [vmem:[#allocation2 + $0x8] sm:$0xff] %v393
        %398 = vst [vmem:[#allocation2 + $0x10] sm:$0xff] %v394
        %v399 = vlaneseq
        %v400 = vand.u32 %v399, 127
        %v401 = vadd.s32 %v400, 128
        %vm402 = vcmp.lt.s32.totalorder %v400, 0
        %v403 = vsub.s32 0, %v400
        %v404 = vsel %vm402, %v403, %v400
        %v405 = vshrl.u32 %v404, 4
        %v406 = vand.u32 %v404, 15
        %v407 = vsub.s32 0, %v406
        %v408 = vsel %vm402, %v407, %v406
        %vm409 = vcmp.lt.s32.totalorder %v401, 0
        %v410 = vsub.s32 0, %v401
        %v411 = vsel %vm409, %v410, %v401
        %v412 = vshrl.u32 %v411, 4
        %v413 = vand.u32 %v411, 15
        %v414 = vsub.s32 0, %v413
        %v415 = vsel %vm409, %v414, %v413
        %vm416 = vcmp.ne.s32.totalorder %v408, 0
        %vm417 = vcmp.ne.s32.totalorder %v415, 0
        %vm418 = vcmp.lt.s32.totalorder %v408, 0
        %vm419 = vcmp.lt.s32.totalorder %v415, 0
        %vm420 = vmand %vm418, %vm416
        %vm421 = vmand %vm419, %vm417
        %v422 = vadd.s32 %v408, 16
        %v423 = vadd.s32 %v415, 16
        %v424 = vsel %vm420, %v422, %v408
        %v425 = vsel %vm421, %v423, %v415
        %vm426 = vcmp.ge.s32.totalorder %v424, 1
        %vm427 = vcmp.ge.s32.totalorder %v425, 1
        %vm428 = vcmp.lt.s32.totalorder %v424, 15
        %vm429 = vcmp.lt.s32.totalorder %v425, 15
        %v430 = vld [vmem:[%s3] sm:$0xff]
        %v431 = vld [vmem:[#allocation2] sm:$0xff]
        %v432 = vld [vmem:[#allocation2 + $0x8] sm:$0xff]
        %v433 = vld [vmem:[#allocation2 + $0x10] sm:$0xff]
        %435 = vset.pattern.permute.xlu0 0
        %436 = vperm.xlu0 %435, %v430
        %v437 = vpop.permute.xlu0 %436
        %v439 = vmul.f32 %v431, %v437
        %v440 = vmul.f32 %v432, %v437
        %v441 = vmul.f32 %v433, %v437
        %445 = vrot.lane.b32.xlu0 %v439, 17
        %v446 = vpop.permute.xlu0 %445
        %447 = vrot.lane.b32.xlu0 %v440, 17
        %v448 = vpop.permute.xlu0 %447
        %449 = vrot.lane.b32.xlu0 %v441, 17
        %v450 = vpop.permute.xlu0 %449
        %vm451 = vcmask 138240
        %v452 = vsel %vm451, %v446, %v448
        %v453 = vsel %vm451, %v448, %v450
        %v456 = vsel %vm426, %v452, 0.0
        %v457 = vsel %vm427, %v453, 0.0
        %458 = vset.pattern.permute.xlu0 1
        %459 = vperm.xlu0 %458, %v430
        %v460 = vpop.permute.xlu0 %459
        %v462 = vmul.f32 %v431, %v460
        %v463 = vmul.f32 %v432, %v460
        %v464 = vmul.f32 %v433, %v460
        %468 = vrot.lane.b32.xlu0 %v462, 16
        %v469 = vpop.permute.xlu0 %468
        %470 = vrot.lane.b32.xlu0 %v463, 16
        %v471 = vpop.permute.xlu0 %470
        %472 = vrot.lane.b32.xlu0 %v464, 16
        %v473 = vpop.permute.xlu0 %472
        %vm474 = vcmask 130048
        %v475 = vsel %vm474, %v469, %v471
        %v476 = vsel %vm474, %v471, %v473
        %v479 = vadd.f32 %v456, %v475
        %v480 = vadd.f32 %v457, %v476
        %481 = vset.pattern.permute.xlu0 2
        %482 = vperm.xlu0 %481, %v430
        %v483 = vpop.permute.xlu0 %482
        %v485 = vmul.f32 %v431, %v483
        %v486 = vmul.f32 %v432, %v483
        %v487 = vmul.f32 %v433, %v483
        %491 = vrot.lane.b32.xlu0 %v485, 15
        %v492 = vpop.permute.xlu0 %491
        %493 = vrot.lane.b32.xlu0 %v486, 15
        %v494 = vpop.permute.xlu0 %493
        %495 = vrot.lane.b32.xlu0 %v487, 15
        %v496 = vpop.permute.xlu0 %495
        %vm497 = vcmask 121856
        %v498 = vsel %vm497, %v492, %v494
        %v499 = vsel %vm497, %v494, %v496
        %v502 = vsel %vm428, %v498, 0.0
        %v503 = vsel %vm429, %v499, 0.0
        %v504 = vadd.f32 %v479, %v502
        %v505 = vadd.f32 %v480, %v503
        %506 = vset.pattern.permute.xlu0 3
        %507 = vperm.xlu0 %506, %v430
        %v508 = vpop.permute.xlu0 %507
        %v510 = vmul.f32 %v431, %v508
        %v511 = vmul.f32 %v432, %v508
        %v512 = vmul.f32 %v433, %v508
        %516 = vrot.lane.b32.xlu0 %v510, 1
        %v517 = vpop.permute.xlu0 %516
        %518 = vrot.lane.b32.xlu0 %v511, 1
        %v519 = vpop.permute.xlu0 %518
        %520 = vrot.lane.b32.xlu0 %v512, 1
        %v521 = vpop.permute.xlu0 %520
        %vm522 = vcmask 7168
        %v523 = vsel %vm522, %v517, %v519
        %v524 = vsel %vm522, %v519, %v521
        %v527 = vsel %vm426, %v523, 0.0
        %v528 = vsel %vm427, %v524, 0.0
        %v529 = vadd.f32 %v504, %v527
        %v530 = vadd.f32 %v505, %v528
        %531 = vset.pattern.permute.xlu0 4
        %532 = vperm.xlu0 %531, %v430
        %v533 = vpop.permute.xlu0 %532
        %v535 = vmul.f32 %v393, %v533
        %v536 = vmul.f32 %v394, %v533
        %v537 = vadd.f32 %v529, %v535
        %v538 = vadd.f32 %v530, %v536
        %v539 = vld [vmem:[#allocation2 + $0x8] sm:$0xff]
        %v540 = vld [vmem:[#allocation2 + $0x10] sm:$0xff]
        %v541 = vld [vmem:[#allocation2 + $0x18] sm:$0xff]
        %542 = vset.pattern.permute.xlu0 5
        %543 = vperm.xlu0 %542, %v430
        %v544 = vpop.permute.xlu0 %543
        %v546 = vmul.f32 %v539, %v544
        %v547 = vmul.f32 %v540, %v544
        %v548 = vmul.f32 %v541, %v544
        %552 = vrot.lane.b32.xlu0 %v546, 127
        %v553 = vpop.permute.xlu0 %552
        %554 = vrot.lane.b32.xlu0 %v547, 127
        %v555 = vpop.permute.xlu0 %554
        %556 = vrot.lane.b32.xlu0 %v548, 127
        %v557 = vpop.permute.xlu0 %556
        %vm558 = vcmask 1039360
        %v559 = vsel %vm558, %v553, %v555
        %v560 = vsel %vm558, %v555, %v557
        %v563 = vsel %vm428, %v559, 0.0
        %v564 = vsel %vm429, %v560, 0.0
        %v565 = vadd.f32 %v537, %v563
        %v566 = vadd.f32 %v538, %v564
        %567 = vset.pattern.permute.xlu0 6
        %568 = vperm.xlu0 %567, %v430
        %v569 = vpop.permute.xlu0 %568
        %v571 = vmul.f32 %v539, %v569
        %v572 = vmul.f32 %v540, %v569
        %v573 = vmul.f32 %v541, %v569
        %577 = vrot.lane.b32.xlu0 %v571, 113
        %v578 = vpop.permute.xlu0 %577
        %579 = vrot.lane.b32.xlu0 %v572, 113
        %v580 = vpop.permute.xlu0 %579
        %581 = vrot.lane.b32.xlu0 %v573, 113
        %v582 = vpop.permute.xlu0 %581
        %vm583 = vcmask 924672
        %v584 = vsel %vm583, %v578, %v580
        %v585 = vsel %vm583, %v580, %v582
        %v588 = vsel %vm426, %v584, 0.0
        %v589 = vsel %vm427, %v585, 0.0
        %v590 = vadd.f32 %v565, %v588
        %v591 = vadd.f32 %v566, %v589
        %592 = vset.pattern.permute.xlu0 7
        %593 = vperm.xlu0 %592, %v430
        %v594 = vpop.permute.xlu0 %593
        %v596 = vmul.f32 %v539, %v594
        %v597 = vmul.f32 %v540, %v594
        %v598 = vmul.f32 %v541, %v594
        %602 = vrot.lane.b32.xlu0 %v596, 112
        %v603 = vpop.permute.xlu0 %602
        %604 = vrot.lane.b32.xlu0 %v597, 112
        %v605 = vpop.permute.xlu0 %604
        %606 = vrot.lane.b32.xlu0 %v598, 112
        %v607 = vpop.permute.xlu0 %606
        %vm608 = vcmask 916480
        %v609 = vsel %vm608, %v603, %v605
        %v610 = vsel %vm608, %v605, %v607
        %v613 = vadd.f32 %v590, %v609
        %v614 = vadd.f32 %v591, %v610
        %615 = vset.pattern.permute.xlu0 8
        %616 = vperm.xlu0 %615, %v430
        %v617 = vpop.permute.xlu0 %616
        %v619 = vmul.f32 %v539, %v617
        %v620 = vmul.f32 %v540, %v617
        %v621 = vmul.f32 %v541, %v617
        %625 = vrot.lane.b32.xlu0 %v619, 111
        %v626 = vpop.permute.xlu0 %625
        %627 = vrot.lane.b32.xlu0 %v620, 111
        %v628 = vpop.permute.xlu0 %627
        %629 = vrot.lane.b32.xlu0 %v621, 111
        %v630 = vpop.permute.xlu0 %629
        %vm631 = vcmask 908288
        %v632 = vsel %vm631, %v626, %v628
        %v633 = vsel %vm631, %v628, %v630
        %v636 = vsel %vm428, %v632, 0.0
        %v637 = vsel %vm429, %v633, 0.0
        %v638 = vadd.f32 %v613, %v636
        %v639 = vadd.f32 %v614, %v637
        %v640 = vld [vmem:[%s4] sm:$0xff]
        %642 = vset.pattern.permute.xlu0 0
        %643 = vperm.xlu0 %642, %v640
        %v644 = vpop.permute.xlu0 %643
        %v646 = vadd.f32 %v638, %v644
        %v647 = vadd.f32 %v639, %v644
        %v648 = vmax.f32 %v646, 0.0
        %v649 = vmax.f32 %v647, 0.0
        %v650 = vmin.f32 %v648, 6.0
        %v651 = vmin.f32 %v649, 6.0
        %v652 = vld [vmem:[%s5] sm:$0xf]
        %v653 = vlaneseq
        %v654 = vshrl.u32 %v653, 7
        %v655 = vsub.s32 0, %v654
        %v656 = vrot.slane %v650, %v655
        %v657 = vlaneseq
        %v658 = vshrl.u32 %v657, 7
        %v659 = vsub.s32 0, %v658
        %v660 = vrot.slane %v651, %v659
        %662 = vset.pattern.permute.xlu0 0
        %663 = vperm.xlu0 %662, %v652
        %v664 = vpop.permute.xlu0 %663
        %v666 = vmul.f32 %v656, %v664
        %v667 = vmul.f32 %v660, %v664
        %v668 = vlaneseq
        %v669 = vshrl.u32 %v668, 7
        %v670 = vsub.s32 1, %v669
        %v671 = vrot.slane %v650, %v670
        %v672 = vlaneseq
        %v673 = vshrl.u32 %v672, 7
        %v674 = vsub.s32 1, %v673
        %v675 = vrot.slane %v651, %v674
        %676 = vset.pattern.permute.xlu0 1
        %677 = vperm.xlu0 %676, %v652
        %v678 = vpop.permute.xlu0 %677
        %v680 = vmul.f32 %v671, %v678
        %v681 = vmul.f32 %v675, %v678
        %v682 = vadd.f32 %v666, %v680
        %v683 = vadd.f32 %v667, %v681
        %v684 = vlaneseq
        %v685 = vshrl.u32 %v684, 7
        %v686 = vsub.s32 2, %v685
        %v687 = vrot.slane %v650, %v686
        %v688 = vlaneseq
        %v689 = vshrl.u32 %v688, 7
        %v690 = vsub.s32 2, %v689
        %v691 = vrot.slane %v651, %v690
        %692 = vset.pattern.permute.xlu0 2
        %693 = vperm.xlu0 %692, %v652
        %v694 = vpop.permute.xlu0 %693
        %v696 = vmul.f32 %v687, %v694
        %v697 = vmul.f32 %v691, %v694
        %v698 = vadd.f32 %v682, %v696
        %v699 = vadd.f32 %v683, %v697
        %v700 = vlaneseq
        %v701 = vshrl.u32 %v700, 7
        %v702 = vsub.s32 3, %v701
        %v703 = vrot.slane %v650, %v702
        %v704 = vlaneseq
        %v705 = vshrl.u32 %v704, 7
        %v706 = vsub.s32 3, %v705
        %v707 = vrot.slane %v651, %v706
        %708 = vset.pattern.permute.xlu0 3
        %709 = vperm.xlu0 %708, %v652
        %v710 = vpop.permute.xlu0 %709
        %v712 = vmul.f32 %v703, %v710
        %v713 = vmul.f32 %v707, %v710
        %v714 = vadd.f32 %v698, %v712
        %v715 = vadd.f32 %v699, %v713
        %v716 = vlaneseq
        %v717 = vshrl.u32 %v716, 7
        %v718 = vsub.s32 4, %v717
        %v719 = vrot.slane %v650, %v718
        %v720 = vlaneseq
        %v721 = vshrl.u32 %v720, 7
        %v722 = vsub.s32 4, %v721
        %v723 = vrot.slane %v651, %v722
        %724 = vset.pattern.permute.xlu0 4
        %725 = vperm.xlu0 %724, %v652
        %v726 = vpop.permute.xlu0 %725
        %v728 = vmul.f32 %v719, %v726
        %v729 = vmul.f32 %v723, %v726
        %v730 = vadd.f32 %v714, %v728
        %v731 = vadd.f32 %v715, %v729
        %v732 = vlaneseq
        %v733 = vshrl.u32 %v732, 7
        %v734 = vsub.s32 5, %v733
        %v735 = vrot.slane %v650, %v734
        %v736 = vlaneseq
        %v737 = vshrl.u32 %v736, 7
        %v738 = vsub.s32 5, %v737
        %v739 = vrot.slane %v651, %v738
        %740 = vset.pattern.permute.xlu0 5
        %741 = vperm.xlu0 %740, %v652
        %v742 = vpop.permute.xlu0 %741
        %v744 = vmul.f32 %v735, %v742
        %v745 = vmul.f32 %v739, %v742
        %v746 = vadd.f32 %v730, %v744
        %v747 = vadd.f32 %v731, %v745
        %v748 = vlaneseq
        %v749 = vshrl.u32 %v748, 7
        %v750 = vsub.s32 6, %v749
        %v751 = vrot.slane %v650, %v750
        %v752 = vlaneseq
        %v753 = vshrl.u32 %v752, 7
        %v754 = vsub.s32 6, %v753
        %v755 = vrot.slane %v651, %v754
        %756 = vset.pattern.permute.xlu0 6
        %757 = vperm.xlu0 %756, %v652
        %v758 = vpop.permute.xlu0 %757
        %v760 = vmul.f32 %v751, %v758
        %v761 = vmul.f32 %v755, %v758
        %v762 = vadd.f32 %v746, %v760
        %v763 = vadd.f32 %v747, %v761
        %v764 = vlaneseq
        %v765 = vshrl.u32 %v764, 7
        %v766 = vsub.s32 7, %v765
        %v767 = vrot.slane %v650, %v766
        %v768 = vlaneseq
        %v769 = vshrl.u32 %v768, 7
        %v770 = vsub.s32 7, %v769
        %v771 = vrot.slane %v651, %v770
        %772 = vset.pattern.permute.xlu0 7
        %773 = vperm.xlu0 %772, %v652
        %v774 = vpop.permute.xlu0 %773
        %v776 = vmul.f32 %v767, %v774
        %v777 = vmul.f32 %v771, %v774
        %v778 = vadd.f32 %v762, %v776
        %v779 = vadd.f32 %v763, %v777
        %v780 = vld [vmem:[%s6] sm:$0xf]
        %782 = vset.pattern.permute.xlu0 0
        %783 = vperm.xlu0 %782, %v780
        %v784 = vpop.permute.xlu0 %783
        %v786 = vadd.f32 %v778, %v784
        %v787 = vadd.f32 %v779, %v784
        %v788 = vcombine.high %v277, %v277
        %v790 = vadd.f32 %v786, %v277
        %v791 = vadd.f32 %v787, %v788
        %v794 = vcombine.low %v790, %v791
        %796 = vst [vmem:[%s271] sm:$0xff] %v794
        %s797 = sand.u32 %s181, 1
        %s798 = scalar_lea.sflag [#allocation4], %s797
        %s799 = sand.u32 %s181, 1
        %s800 = smul.addr %s799, 8
        %s801 = scalar_lea.vmem [#allocation3], %s800
        // Predicated region
        $region49: #{tpu_custom_call.1} parent=47 // pred_check
          %p802 = pneg %p191
        $region50: #{tpu_custom_call.1} parent=47 // pred_check_branch
          %804 = sbr.rel (%p802) target = $region52
        $region51: #{tpu_custom_call.1} parent=47 // pred_region
          %s806 = ssub.s32 128, 128
          %807 = vsyncadd %s798, %s806
          %s808 = smul.addr %s21, 2
          %s809 = smul.addr %s808, 64
          %s810 = scalar_lea.hbm %s7, %s809
          %s812 = sshll.u32 %s801, 4
          %s813 = int_to_ptr.vmem [resolvable:$true] %s812
          %815 = dma.vmem_to_hbm [thread:$0]  %s813, 128, %s810, %s798
        $region52: #{tpu_custom_call.1} parent=47 // pred_fallthru
          _
      $region48: #{tpu_custom_call.1} parent=5 // pred_fallthru
        _
      %p816 = scmp.le.s32.totalorder 2, %s16
      // Predicated region
      $region53: #{tpu_custom_call.1} parent=5 // pred_check
        %p817 = pneg %p816
      $region54: #{tpu_custom_call.1} parent=5 // pred_check_branch
        %819 = sbr.rel (%p817) target = $region56
      $region55: #{tpu_custom_call.1} parent=5 // pred_region
        %s820 = ssub.s32 %s16, 2
        // Predicated region
        $region57: #{tpu_custom_call.1} parent=55 // pred_check
          %p821 = pneg %p197
        $region58: #{tpu_custom_call.1} parent=55 // pred_check_branch
          %823 = sbr.rel (%p821) target = $region60
        $region59: #{tpu_custom_call.1} parent=55 // pred_region
          %s824 = sand.u32 %s182, 1
          %s825 = scalar_lea.sflag [#allocation4], %s824
          %s826 = sand.u32 %s182, 1
          %s827 = smul.addr %s826, 8
          %s828 = scalar_lea.vmem [#allocation3], %s827
          %829 = dma.done %s825, 128
        $region60: #{tpu_custom_call.1} parent=55 // pred_fallthru
          _
      $region56: #{tpu_custom_call.1} parent=5 // pred_fallthru
        _
    $region6: #{tpu_custom_call.1} parent=1 // loop_footer
      %s20 = sadd.s32 1, %s16
    $region7: #{tpu_custom_call.1} parent=1 // loop_footer_branch
      %15 = sbr.rel target = $region3
    $region8: #{tpu_custom_call.1} parent=1 // loop_exit
      _
    %830 = vsyncpa [#allocation4], 1
    %s831 = scalar_lea.sflag [#allocation4], 1
    %832 = vsyncpa %s831, 1

</llo_original>
